<compile_context>
chip_gen: v6e
topology: v6e:2x2x1
jax: 0.10.0
libtpu: 0.0.40
codegen_flags: <defaults>
</compile_context>

<pallas_src>
import jax
import jax.numpy as jnp
from jax.experimental import pallas as pl
from jax.experimental.pallas import tpu as pltpu


def _round_up(n, m):
    return ((n + m - 1) // m) * m


def join_conv_kernel(x_ref, k_ref, bias_ref, o_ref):
    # x_ref: (TB, C*S) bf16   k_ref: (C*S, OS_pad) bf16
    # bias_ref: (1, OS_pad) f32   o_ref: (TB, OS_pad) out dtype
    acc = jnp.dot(x_ref[...], k_ref[...], preferred_element_type=jnp.float32)
    o_ref[...] = (acc + bias_ref[...]).astype(o_ref.dtype)


def fuse_join_operator(filt, dlt, dlt_inv):
    """K[c*S+l, o*S+n] = sum_m dlt_inv[n,m] * filt[c,o,m] * dlt[m,l]  -> (C*S, O*S) f32."""
    C, O, S = filt.shape
    return jnp.einsum(
        "nm,com,ml->clon",
        dlt_inv.astype(jnp.float32),
        filt.astype(jnp.float32),
        dlt.astype(jnp.float32),
    ).reshape(C * S, O * S)


def join_conv(x, filt, dlt, dlt_inv, bias, *, tb=1024,
              compute_dtype=jnp.bfloat16, k_fused=None):
    """out[b,o,n] = sum_{c,m,l} dlt_inv[n,m]*filt[c,o,m]*dlt[m,l]*x[b,c,l] + bias[o,n]."""
    B, C, S = x.shape
    O = filt.shape[1]
    CS, OS = C * S, O * S
    OS_pad = _round_up(OS, 128)          # lane-dense output width (unmasked vst)

    # Fused loop-invariant operator (hoist via k_fused= when weights are static).
    if k_fused is None:
        k_fused = fuse_join_operator(filt, dlt, dlt_inv)
    if OS_pad != OS:
        k_fused = jnp.pad(k_fused, ((0, 0), (0, OS_pad - OS)))
    k_cd = k_fused.astype(compute_dtype)

    # Bias kept in float32 end-to-end (no precision round-trip).
    bias_flat = bias.reshape(1, OS).astype(jnp.float32)
    if OS_pad != OS:
        bias_flat = jnp.pad(bias_flat, ((0, 0), (0, OS_pad - OS)))

    # Flatten (C, S) -> C*S; cast activations to the MXU compute dtype.
    x_flat = x.reshape(B, CS).astype(compute_dtype)

    # Pad batch only to the sublane multiple of 8 (<=7 dead rows, no full HBM copy).
    b_pad = _round_up(B, 8)
    if b_pad != B:
        x_flat = jnp.pad(x_flat, ((0, b_pad - B), (0, 0)))

    # Batch tile: large to amortize per-step overhead, multiple of 8 sublanes,
    # but keep >=2 grid steps when possible so v7x's two TensorCores both work.
    tb = max(8, _round_up(min(tb, b_pad), 8))
    if b_pad > 8 and pl.cdiv(b_pad, tb) < 2:
        tb = max(8, _round_up(pl.cdiv(b_pad, 2), 8))
    grid_b = pl.cdiv(b_pad, tb)

    out_dtype = x.dtype
    cd_bytes = jnp.dtype(compute_dtype).itemsize
    out_bytes = jnp.dtype(out_dtype).itemsize
    # Double-buffered x/out tiles + resident (double-buffered) K + bias, with headroom.
    footprint = (2 * tb * CS * cd_bytes
                 + 2 * tb * OS_pad * out_bytes
                 + 2 * CS * OS_pad * cd_bytes
                 + 2 * OS_pad * 4)
    vmem_limit = int(min(64 * 1024 * 1024, max(32 * 1024 * 1024, 4 * footprint)))

    out_flat = pl.pallas_call(
        join_conv_kernel,
        out_shape=jax.ShapeDtypeStruct((b_pad, OS_pad), out_dtype),
        grid=(grid_b,),
        in_specs=[
            pl.BlockSpec((tb, CS), lambda i: (i, 0)),        # x batch tile
            pl.BlockSpec((CS, OS_pad), lambda i: (0, 0)),    # fused operator (loop-invariant)
            pl.BlockSpec((1, OS_pad), lambda i: (0, 0)),     # bias (loop-invariant, f32)
        ],
        out_specs=pl.BlockSpec((tb, OS_pad), lambda i: (i, 0)),
        compiler_params=pltpu.CompilerParams(
            dimension_semantics=("parallel",),
            vmem_limit_bytes=vmem_limit,
        ),
    )(x_flat, k_cd, bias_flat)

    return out_flat[:B, :OS].reshape(B, O, S)


def _kaiming_normal(key, shape, a=0.01):
    # torch.nn.init.kaiming_normal_ (fan_in, leaky_relu): fan_in = prod(shape[1:]),
    # gain = sqrt(2 / (1 + a^2)), std = gain / sqrt(fan_in)
    fan_in = 1
    for d in shape[1:]:
        fan_in *= d
    gain = (2.0 / (1.0 + a * a)) ** 0.5
    std = gain / (fan_in ** 0.5)
    return std * jax.random.normal(key, shape, dtype=jnp.float32)


if __name__ == "__main__":
    B, C, O, S = 2, 4, 4, 16   # batch, in_channels, out_channels, lattice nodes

    key = jax.random.PRNGKey(0)
    k_x, k_f, k_b = jax.random.split(key, 3)

    # Synthetic deterministic lattice: zeta matrix of a total order + its Mobius inverse.
    dlt = jnp.tril(jnp.ones((S, S), dtype=jnp.float32))
    dlt_inv = jnp.linalg.inv(dlt).astype(jnp.float32)

    filt = _kaiming_normal(k_f, (C, O, S))       # filter: (in_channels, out_channels, size)
    bias = _kaiming_normal(k_b, (O, S))          # bias:   (out_channels, size)
    x = jax.random.normal(k_x, (B, C, S), dtype=jnp.float32)   # input: (B, C, S)

    out = jax.block_until_ready(join_conv(x, filt, dlt, dlt_inv, bias))
    assert out.shape == (B, O, S)

    # (1) Tight check against a reference using the SAME bf16-quantized x and K
    #     (validates the kernel itself; only f32 accumulation-order differences remain).
    k_f32 = fuse_join_operator(filt, dlt, dlt_inv)
    x_q = x.reshape(B, C * S).astype(jnp.bfloat16).astype(jnp.float32)
    k_q = k_f32.astype(jnp.bfloat16).astype(jnp.float32)
    ref_q = (jnp.dot(x_q, k_q, precision=jax.lax.Precision.HIGHEST)
             .reshape(B, O, S) + bias[None])
    assert jnp.allclose(out, ref_q, atol=1e-3, rtol=1e-3), "mismatch vs bf16-quantized reference"

    # (2) Loose semantic check against the full-precision einsum 'nm,com,ml,bcl->bon' + bias
    #     (expected bf16 quantization error only).
    ref = jnp.einsum("nm,com,ml,bcl->bon", dlt_inv, filt, dlt, x) + bias[None]
    assert jnp.allclose(out, ref, atol=5e-2, rtol=5e-2), "mismatch vs f32 reference einsum"

    print("KERNEL_OK")
</pallas_src>

<mosaic_0001>
module attributes {stable_mosaic.version = 11 : i64} {
  func.func @join_conv_kernel(%arg0: i32, %arg1: memref<8x64xbf16, #tpu.memory_space<vmem>>, %arg2: memref<64x128xbf16, #tpu.memory_space<vmem>>, %arg3: memref<1x128xf32, #tpu.memory_space<vmem>>, %arg4: memref<8x128xf32, #tpu.memory_space<vmem>>) attributes {dimension_semantics = [#tpu.dimension_semantics<parallel>], iteration_bounds = array<i64: 1>, scalar_prefetch = 0 : i64, scratch_operands = 0 : i64, tpu.core_type = #tpu.core_type<tc>, window_params = [{transform_indices = @transform_0, window_bounds = array<i64: 8, 64>}, {pipeline_mode = #tpu.pipeline_mode<synchronous>, transform_indices = @transform_1, window_bounds = array<i64: 64, 128>}, {pipeline_mode = #tpu.pipeline_mode<synchronous>, transform_indices = @transform_2, window_bounds = array<i64: 1, 128>}, {transform_indices = @transform_3, window_bounds = array<i64: 8, 128>}]} {
    %c0 = arith.constant 0 : index
    %c0_0 = arith.constant 0 : index
    %0 = vector.load %arg1[%c0, %c0_0] : memref<8x64xbf16, #tpu.memory_space<vmem>>, vector<8x64xbf16>
    %c0_1 = arith.constant 0 : index
    %c0_2 = arith.constant 0 : index
    %1 = vector.load %arg2[%c0_1, %c0_2] : memref<64x128xbf16, #tpu.memory_space<vmem>>, vector<64x128xbf16>
    %cst = arith.constant dense<0.000000e+00> : vector<8x128xf32>
    %2 = tpu.matmul %0, %1, %cst {dimension_numbers = #tpu.dot_dimension_numbers<[1], [0], [0], [1], [0, 0, 1, 1], [], []>} : vector<8x64xbf16>, vector<64x128xbf16>, vector<8x128xf32> -> vector<8x128xf32>
    %c0_3 = arith.constant 0 : index
    %c0_4 = arith.constant 0 : index
    %3 = vector.load %arg3[%c0_3, %c0_4] : memref<1x128xf32, #tpu.memory_space<vmem>>, vector<1x128xf32>
    %4 = vector.broadcast %3 : vector<1x128xf32> to vector<8x128xf32>
    %5 = arith.addf %2, %4 : vector<8x128xf32>
    %c0_5 = arith.constant 0 : index
    %c0_6 = arith.constant 0 : index
    %6 = vector.load %arg4[%c0_5, %c0_6] : memref<8x128xf32, #tpu.memory_space<vmem>>, vector<8x128xf32>
    tpu.vector_store %arg4[%c0_5, %c0_6], %5 {strides = array<i32>} : memref<8x128xf32, #tpu.memory_space<vmem>>, vector<8x128xf32>,
    return
  }
  func.func @transform_0(%arg0: i32) -> (i32, i32) {
    %c0_i32 = arith.constant 0 : i32
    %c0_i32_0 = arith.constant 0 : i32
    return %arg0, %c0_i32 : i32, i32
  }
  func.func @transform_1(%arg0: i32) -> (i32, i32) {
    %c0_i32 = arith.constant 0 : i32
    %c0_i32_0 = arith.constant 0 : i32
    %c0_i32_1 = arith.constant 0 : i32
    return %c0_i32, %c0_i32_0 : i32, i32
  }
  func.func @transform_2(%arg0: i32) -> (i32, i32) {
    %c0_i32 = arith.constant 0 : i32
    %c0_i32_0 = arith.constant 0 : i32
    %c0_i32_1 = arith.constant 0 : i32
    return %c0_i32, %c0_i32_0 : i32, i32
  }
  func.func @transform_3(%arg0: i32) -> (i32, i32) {
    %c0_i32 = arith.constant 0 : i32
    %c0_i32_0 = arith.constant 0 : i32
    return %arg0, %c0_i32 : i32, i32
  }
}

</mosaic_0001>

<llo_original>
// kernel: tpu_custom_call.1
$region0: #{tpu_custom_call.1}
  #allocation0 [shape = 'u32[]', space=smem, size = 0x4, offset = 0x4, fixed_abs, tag = 'smem constant byte address 0x4 - core index']
  #allocation1 [shape = 'u32[144,128]{1,0:T(1,128)}', space=vmem, size = 0x12000, scoped, tag = 'internal scratch']
  %s0 = inlined_call_operand.hbm [shape: bf16[8,64], index: 0, kind: input, shape index: {}]
  %s1 = inlined_call_operand.hbm [shape: bf16[64,128], index: 1, kind: input, shape index: {}]
  %s2 = inlined_call_operand.vmem [shape: f32[1,128], index: 2, kind: input, shape index: {}]
  %s3 = inlined_call_operand.hbm [shape: f32[8,128], index: 3, kind: output, shape index: {}]
  %s4 = sld [smem:[#allocation0]]
  $region30: #{tpu_custom_call.1} parent=0
    _
  %s6 = ssub.s32 1, %s4
  %s7 = scalar_select 0, %s6, %s4
  $region1: #{tpu_custom_call.1} parent=0
    #allocation2 [shape = 'u8[2048]{0}', space=vmem, size = 0x800, scoped, tag = 'input window, operand 0, single buffered']
    #allocation3 [shape = 's32[1]{0}', space=sflag, size = 0x4, scoped, tag = 'scoped memory for tpu_custom_call.1']
    #allocation4 [shape = 's32[1]{0}', space=sflag, size = 0x4, scoped, tag = 'scoped memory for tpu_custom_call.1']
    #allocation5 [shape = 'u8[16384]{0}', space=vmem, size = 0x4000, scoped, tag = 'input window, operand 1, single buffered']
    #allocation6 [shape = 's32[1]{0}', space=sflag, size = 0x4, scoped, tag = 'scoped memory for tpu_custom_call.1']
    #allocation7 [shape = 'u8[4096]{0}', space=vmem, size = 0x1000, scoped, tag = 'output window, operand 0, single buffered']
    %8 = vsyncpa [#allocation3], 0
    %9 = vsyncpa [#allocation6], 0
    %10 = vsyncpa [#allocation4], 0
    // Predicated region
    $region2: #{tpu_custom_call.1} parent=1 // pred_check
      _
    $region3: #{tpu_custom_call.1} parent=1 // pred_check_branch
      %12 = sbr.rel (0) target = $region5
    $region4: #{tpu_custom_call.1} parent=1 // pred_region
      %s14 = ssub.s32 64, 64
      %15 = vsyncadd [#allocation3], %s14
      %s17 = sshll.u32 [#allocation2], 4
      %s18 = int_to_ptr.vmem [resolvable:$true] %s17
      %20 = dma.hbm_to_vmem [thread:$0]  %s0, 64, %s18, [#allocation3]
    $region5: #{tpu_custom_call.1} parent=1 // pred_fallthru
      _
    // Predicated region
    $region6: #{tpu_custom_call.1} parent=1 // pred_check
      _
    $region7: #{tpu_custom_call.1} parent=1 // pred_check_branch
      %22 = sbr.rel (0) target = $region9
    $region8: #{tpu_custom_call.1} parent=1 // pred_region
      %s24 = ssub.s32 512, 512
      %25 = vsyncadd [#allocation6], %s24
      %s26 = sshll.u32 [#allocation5], 4
      %s27 = int_to_ptr.vmem [resolvable:$true] %s26
      %32 = dma.hbm_to_vmem [thread:$0]  %s1, 512, %s27, [#allocation6], 64, 64, 4
    $region9: #{tpu_custom_call.1} parent=1 // pred_fallthru
      _
    // Predicated region
    $region10: #{tpu_custom_call.1} parent=1 // pred_check
      _
    $region11: #{tpu_custom_call.1} parent=1 // pred_check_branch
      %34 = sbr.rel (0) target = $region13
    $region12: #{tpu_custom_call.1} parent=1 // pred_region
      _
    $region13: #{tpu_custom_call.1} parent=1 // pred_fallthru
      _
    // Predicated region
    $region14: #{tpu_custom_call.1} parent=1 // pred_check
      _
    $region15: #{tpu_custom_call.1} parent=1 // pred_check_branch
      %36 = sbr.rel (0) target = $region17
    $region16: #{tpu_custom_call.1} parent=1 // pred_region
      %37 = dma.done [#allocation3], 64
    $region17: #{tpu_custom_call.1} parent=1 // pred_fallthru
      _
    // Predicated region
    $region18: #{tpu_custom_call.1} parent=1 // pred_check
      _
    $region19: #{tpu_custom_call.1} parent=1 // pred_check_branch
      %39 = sbr.rel (0) target = $region21
    $region20: #{tpu_custom_call.1} parent=1 // pred_region
      %40 = dma.done [#allocation6], 512
    $region21: #{tpu_custom_call.1} parent=1 // pred_fallthru
      _
    %v42 = vld [vmem:[#allocation2] sm:$0xf]
    %v43 = vld [vmem:[#allocation5] sm:$0xf]
    %v44 = vld [vmem:[#allocation5 + $0x4] sm:$0xf]
    %v45 = vld [vmem:[#allocation5 + $0x8] sm:$0xf]
    %v46 = vld [vmem:[#allocation5 + $0xc] sm:$0xf]
    %v47 = vld [vmem:[#allocation5 + $0x10] sm:$0xf]
    %v48 = vld [vmem:[#allocation5 + $0x14] sm:$0xf]
    %v49 = vld [vmem:[#allocation5 + $0x18] sm:$0xf]
    %v50 = vld [vmem:[#allocation5 + $0x1c] sm:$0xf]
    %v51 = vld [vmem:[%s2] sm:$0x1]
    %v53 = vlaneseq
    %v54 = vshrl.u32 %v53, 7
    %v55 = vsub.s32 0, %v54
    %v56 = vrot.slane %v51, %v55
    %v66 = vunpack.c.l.b16 %v43
    %v67 = vunpack.c.l.b16 %v44
    %v68 = vunpack.c.l.b16 %v45
    %v69 = vunpack.c.l.b16 %v46
    %v70 = vunpack.c.l.b16 %v47
    %v71 = vunpack.c.l.b16 %v48
    %v72 = vunpack.c.l.b16 %v49
    %v73 = vunpack.c.l.b16 %v50
    %v74 = vpack.c.b16 %v67, %v66
    %v75 = vpack.c.b16 %v69, %v68
    %v76 = vpack.c.b16 %v71, %v70
    %v77 = vpack.c.b16 %v73, %v72
    %vm82 = vcmask 523264
    %v84 = vsel %vm82, %v42, 0
    %86 = vmatprep.subr.bf16.mxu0 0
    %87 = vmatpush1.bf16.msra.mxu0 0
    %88 = vmatprep.subr.bf16.mxu0 0
    %89 = vmatpush1.bf16.msra.mxu0 0
    %90 = vmatprep.subr.bf16.mxu0 0
    %91 = vmatpush1.bf16.msra.mxu0 0
    %92 = vmatprep.subr.bf16.mxu0 0
    %93 = vmatpush1.bf16.msra.mxu0 0
    %94 = vmatprep.subr.bf16.mxu0 0
    %95 = vmatpush1.bf16.msra.mxu0 %v77
    %96 = vmatprep.subr.bf16.mxu0 0
    %97 = vmatpush1.bf16.msra.mxu0 %v76
    %98 = vmatprep.subr.bf16.mxu0 0
    %99 = vmatpush1.bf16.msra.mxu0 %v75
    %100 = vmatprep.subr.bf16.mxu0 0
    %101 = vmatpush1.bf16.msra.mxu0 %v74
    %102 = vmatprep.subr.bf16.mxu0 0
    %103 = vmatpush2.bf16.msra.mxu0 0
    %104 = vmatprep.subr.bf16.mxu0 0
    %105 = vmatpush2.bf16.msra.mxu0 0
    %106 = vmatprep.subr.bf16.mxu0 0
    %107 = vmatpush2.bf16.msra.mxu0 0
    %108 = vmatprep.subr.bf16.mxu0 0
    %109 = vmatpush2.bf16.msra.mxu0 0
    %110 = vmatprep.subr.bf16.mxu0 0
    %111 = vmatpush2.bf16.msra.mxu0 0
    %112 = vmatprep.subr.bf16.mxu0 0
    %113 = vmatpush2.bf16.msra.mxu0 0
    %114 = vmatprep.subr.bf16.mxu0 0
    %115 = vmatpush2.bf16.msra.mxu0 0
    %116 = vmatprep.subr.bf16.mxu0 0
    %117 = vmatpush2.bf16.msra.mxu0 0
    %118 = vmatprep.mubr.bf16.mxu0 0
    %119 = vmatmul.mubr.bf16.gmra.mxu0 %v84
    %v120 = vpop.f32.mrf.mxu0
    %v121 = vadd.f32 %v56, %v120
    %v122 = vpop.f32.mrf.mxu0
    %v123 = vpop.f32.mrf.mxu0
    %v124 = vpop.f32.mrf.mxu0
    %125 = vdwg.mxu0
    %126 = vst [vmem:[#allocation7] sm:$0xff] %v121
    // Predicated region
    $region22: #{tpu_custom_call.1} parent=1 // pred_check
      _
    $region23: #{tpu_custom_call.1} parent=1 // pred_check_branch
      %128 = sbr.rel (0) target = $region25
    $region24: #{tpu_custom_call.1} parent=1 // pred_region
      %s130 = ssub.s32 128, 128
      %131 = vsyncadd [#allocation4], %s130
      %s133 = sshll.u32 [#allocation7], 4
      %s134 = int_to_ptr.vmem [resolvable:$true] %s133
      %136 = dma.vmem_to_hbm [thread:$0]  %s134, 128, %s3, [#allocation4]
    $region25: #{tpu_custom_call.1} parent=1 // pred_fallthru
      _
    // Predicated region
    $region26: #{tpu_custom_call.1} parent=1 // pred_check
      _
    $region27: #{tpu_custom_call.1} parent=1 // pred_check_branch
      %138 = sbr.rel (0) target = $region29
    $region28: #{tpu_custom_call.1} parent=1 // pred_region
      %139 = dma.done [#allocation4], 128
    $region29: #{tpu_custom_call.1} parent=1 // pred_fallthru
      _
    %140 = vsyncpa [#allocation3], 1
    %141 = vsyncpa [#allocation6], 1
    %142 = vsyncpa [#allocation4], 1

</llo_original>
